<compile_context>
chip_gen: v5e
topology: v5e:2x2
jax: 0.10.0
libtpu: 0.0.40
codegen_flags: <defaults>
</compile_context>

<pallas_src>
import functools

import jax
import jax.numpy as jnp
from jax.experimental import pallas as pl
from jax.experimental.pallas import tpu as pltpu


# -----------------------------------------------------------------------------
# Pallas kernel: streaming sequence mean-pool + linear head
# -----------------------------------------------------------------------------
def _classifier_kernel(reps_ref, w_ref, b_ref, logits_ref, emb_ref, acc_ref, *,
                       inv_len):
    # reps_ref : (tB, tL, D)  stream dtype (bf16)
    # w_ref    : (D, Cp)      float32  (transposed nn.Linear weight, C padded)
    # b_ref    : (1, Cp)      float32
    # acc_ref  : (tB, D)      float32 scratch accumulator (resident across L)
    l = pl.program_id(1)

    @pl.when(l == 0)
    def _zero():
        acc_ref[...] = jnp.zeros_like(acc_ref)

    # Stream one sequence tile; upcast to f32 before accumulating (v5e's VPU
    # has no bf16 adds) and reduce the tile's sequence axis.
    acc_ref[...] += jnp.sum(reps_ref[...].astype(jnp.float32), axis=1)

    @pl.when(l == pl.num_programs(1) - 1)
    def _finalize():
        # Scale once with the TRUE sequence length (padding rows are zeros).
        pooled = acc_ref[...] * inv_len                       # (tB, D) f32
        emb_ref[...] = pooled.astype(emb_ref.dtype)
        logits = jnp.dot(pooled, w_ref[...],
                         preferred_element_type=jnp.float32)  # (tB, Cp) on MXU
        logits_ref[...] = (logits + b_ref[...]).astype(logits_ref.dtype)


def _round_up(x, m):
    return ((x + m - 1) // m) * m


def _choose_tiles(B, L, D, stream_dtype):
    """Pick (tB, tL) so 2 * tB * tL * D * itemsize stays well under scoped VMEM.

    Sized against the smallest budget (v7x: 64 MiB physical / 32 MiB scoped
    default); v5e/v6e simply get fewer pipeline steps at the same tile.
    """
    itemsize = jnp.dtype(stream_dtype).itemsize
    tB = B if B <= 8 else 8
    budget = 8 * 1024 * 1024                       # bytes per reps buffer
    tL = budget // max(1, tB * D * itemsize)
    tL = max(8, min(512, (tL // 8) * 8))           # multiple of 8 sublanes
    tL = min(tL, _round_up(L, 8))
    return tB, tL


def protein_classifier_head(reps, w_t, b, *, stream_dtype=jnp.bfloat16,
                            vmem_limit_bytes=None):
    """reps: (B, L, D), w_t: (D, C), b: (C,) -> (logits (B, C), emb (B, D))."""
    B, L, D = reps.shape
    C = w_t.shape[1]

    tB, tL = _choose_tiles(B, L, D, stream_dtype)
    B_pad = _round_up(B, tB)
    L_pad = _round_up(L, tL)
    Cp = _round_up(C, 128)                 # lane-dense logits store

    # Stream reps in bf16 (halves the dominant HBM traffic); zero-pad the
    # ragged batch/sequence edges (zeros do not perturb the sum; the mean uses
    # the true L).
    reps_s = reps.astype(stream_dtype)
    if (B_pad, L_pad) != (B, L):
        reps_s = jnp.pad(reps_s, ((0, B_pad - B), (0, L_pad - L), (0, 0)))
    w_p = jnp.pad(w_t.astype(jnp.float32), ((0, 0), (0, Cp - C)))
    b_p = jnp.pad(b.astype(jnp.float32).reshape(1, C), ((0, 0), (0, Cp - C)))

    grid = (B_pad // tB, L_pad // tL)      # (parallel batch, arbitrary reduction)
    kernel = functools.partial(_classifier_kernel, inv_len=1.0 / float(L))

    cp_kwargs = dict(dimension_semantics=("parallel", "arbitrary"))
    if vmem_limit_bytes is not None:
        cp_kwargs["vmem_limit_bytes"] = vmem_limit_bytes

    logits_p, emb_p = pl.pallas_call(
        kernel,
        out_shape=(
            jax.ShapeDtypeStruct((B_pad, Cp), jnp.float32),   # logits (padded)
            jax.ShapeDtypeStruct((B_pad, D), jnp.float32),    # pooled embeddings
        ),
        grid=grid,
        in_specs=[
            pl.BlockSpec((tB, tL, D), lambda i, l: (i, l, 0)),   # streamed reps
            pl.BlockSpec((D, Cp), lambda i, l: (0, 0)),          # resident weight
            pl.BlockSpec((1, Cp), lambda i, l: (0, 0)),          # resident bias
        ],
        out_specs=(
            pl.BlockSpec((tB, Cp), lambda i, l: (i, 0)),   # constant across L
            pl.BlockSpec((tB, D), lambda i, l: (i, 0)),    # constant across L
        ),
        scratch_shapes=[pltpu.VMEM((tB, D), jnp.float32)],   # pooled-sum accumulator
        compiler_params=pltpu.CompilerParams(**cp_kwargs),
    )(reps_s, w_p, b_p)

    return logits_p[:B, :C], emb_p[:B, :]


# -----------------------------------------------------------------------------
# Synthetic stand-in for the frozen ESM backbone (plain-JAX glue)
# -----------------------------------------------------------------------------
# TODO(synk): the real ESM-2 (36-layer, 2560-dim) transformer backbone is an
# external pretrained model and is not re-implemented; a deterministic
# token-embedding lookup stands in so the classifier head has realistic inputs.
def fake_esm_representations(tokens, embed_table):
    # tokens: (B, L) int32 -> (B, L, D) float32
    return jnp.take(embed_table, tokens, axis=0)


# -----------------------------------------------------------------------------
# Full forward (mirrors ProteinClassifier.forward)
# -----------------------------------------------------------------------------
def protein_classifier_forward(tokens, embed_table, w_t, b):
    reps = fake_esm_representations(tokens, embed_table)          # (B, L, D)
    logits, embeddings = protein_classifier_head(reps, w_t, b)
    return logits, embeddings


if __name__ == "__main__":
    # Small shapes consistent with the module (embedding_dim scaled down).
    B, L, D, C, VOCAB = 2, 8, 32, 2, 33

    key = jax.random.PRNGKey(0)
    k_tok, k_emb, k_w, k_b = jax.random.split(key, 4)

    tokens = jax.random.randint(k_tok, (B, L), 0, VOCAB, dtype=jnp.int32)
    embed_table = jax.random.normal(k_emb, (VOCAB, D), dtype=jnp.float32)

    # nn.Linear(D, C): weight (C, D), bias (C,). Store weight transposed (D, C).
    w = jax.random.normal(k_w, (C, D), dtype=jnp.float32) * (1.0 / jnp.sqrt(D))
    b = jax.random.normal(k_b, (C,), dtype=jnp.float32) * 0.01
    w_t = w.T                       # (D, C)

    logits, embeddings = protein_classifier_forward(tokens, embed_table, w_t, b)
    jax.block_until_ready((logits, embeddings))

    # Reference with the same numerics as the kernel (bf16 streamed, f32 acc).
    reps_f32 = jnp.take(embed_table, tokens, axis=0)
    reps_bf = reps_f32.astype(jnp.bfloat16).astype(jnp.float32)
    emb_ref = reps_bf.mean(axis=1)
    logits_ref = emb_ref @ w.T + b
    assert jnp.allclose(embeddings, emb_ref, atol=1e-5, rtol=1e-5)
    assert jnp.allclose(logits, logits_ref, atol=1e-5, rtol=1e-5)

    # Looser check against pure-f32 PyTorch semantics (bf16 streaming error).
    emb_f32 = reps_f32.mean(axis=1)
    logits_f32 = emb_f32 @ w.T + b
    assert jnp.allclose(embeddings, emb_f32, atol=5e-2, rtol=5e-2)
    assert jnp.allclose(logits, logits_f32, atol=5e-2, rtol=5e-2)

    assert logits.shape == (B, C) and embeddings.shape == (B, D)

    print("KERNEL_OK")
</pallas_src>

<mosaic_0001>
module attributes {stable_mosaic.version = 11 : i64} {
  func.func @_classifier_kernel(%arg0: i32, %arg1: i32, %arg2: memref<2x8x32xbf16, #tpu.memory_space<vmem>>, %arg3: memref<32x128xf32, #tpu.memory_space<vmem>>, %arg4: memref<1x128xf32, #tpu.memory_space<vmem>>, %arg5: memref<2x128xf32, #tpu.memory_space<vmem>>, %arg6: memref<2x32xf32, #tpu.memory_space<vmem>>, %arg7: memref<2x32xf32, #tpu.memory_space<vmem>>) attributes {dimension_semantics = [#tpu.dimension_semantics<parallel>, #tpu.dimension_semantics<arbitrary>], iteration_bounds = array<i64: 1, 1>, scalar_prefetch = 0 : i64, scratch_operands = 1 : i64, tpu.core_type = #tpu.core_type<tc>, window_params = [{transform_indices = @transform_0, window_bounds = array<i64: 2, 8, 32>}, {pipeline_mode = #tpu.pipeline_mode<synchronous>, transform_indices = @transform_1, window_bounds = array<i64: 32, 128>}, {pipeline_mode = #tpu.pipeline_mode<synchronous>, transform_indices = @transform_2, window_bounds = array<i64: 1, 128>}, {transform_indices = @transform_3, window_bounds = array<i64: 2, 128>}, {transform_indices = @transform_4, window_bounds = array<i64: 2, 32>}]} {
    %c0_i32 = arith.constant 0 : i32
    %0 = arith.cmpi eq, %arg1, %c0_i32 : i32
    %1 = arith.extui %0 : i1 to i32
    %c0_i32_0 = arith.constant 0 : i32
    %2 = arith.cmpi ne, %1, %c0_i32_0 : i32
    scf.if %2 {
      %cst_9 = arith.constant 0.000000e+00 : f32
      %12 = vector.broadcast %cst_9 : f32 to vector<2x32xf32>
      %c0_10 = arith.constant 0 : index
      %c0_11 = arith.constant 0 : index
      %13 = vector.load %arg7[%c0_10, %c0_11] : memref<2x32xf32, #tpu.memory_space<vmem>>, vector<2x32xf32>
      tpu.vector_store %arg7[%c0_10, %c0_11], %12 {strides = array<i32>} : memref<2x32xf32, #tpu.memory_space<vmem>>, vector<2x32xf32>,
    } else {
    }
    %c0 = arith.constant 0 : index
    %c0_1 = arith.constant 0 : index
    %3 = vector.load %arg7[%c0, %c0_1] : memref<2x32xf32, #tpu.memory_space<vmem>>, vector<2x32xf32>
    %c0_2 = arith.constant 0 : index
    %c0_3 = arith.constant 0 : index
    %c0_4 = arith.constant 0 : index
    %4 = vector.load %arg2[%c0_2, %c0_3, %c0_4] : memref<2x8x32xbf16, #tpu.memory_space<vmem>>, vector<2x8x32xbf16>
    %5 = arith.extf %4 : vector<2x8x32xbf16> to vector<2x8x32xf32>
    %cst = arith.constant dense<0.000000e+00> : vector<2x32xf32>
    %6 = vector.multi_reduction <add>, %5, %cst [1] : vector<2x8x32xf32> to vector<2x32xf32>
    %7 = arith.addf %3, %6 : vector<2x32xf32>
    %c0_5 = arith.constant 0 : index
    %c0_6 = arith.constant 0 : index
    %8 = vector.load %arg7[%c0_5, %c0_6] : memref<2x32xf32, #tpu.memory_space<vmem>>, vector<2x32xf32>
    tpu.vector_store %arg7[%c0_5, %c0_6], %7 {strides = array<i32>} : memref<2x32xf32, #tpu.memory_space<vmem>>, vector<2x32xf32>,
    %c0_i32_7 = arith.constant 0 : i32
    %9 = arith.cmpi eq, %arg1, %c0_i32_7 : i32
    %10 = arith.extui %9 : i1 to i32
    %c0_i32_8 = arith.constant 0 : i32
    %11 = arith.cmpi ne, %10, %c0_i32_8 : i32
    scf.if %11 {
      %c0_9 = arith.constant 0 : index
      %c0_10 = arith.constant 0 : index
      %12 = vector.load %arg7[%c0_9, %c0_10] : memref<2x32xf32, #tpu.memory_space<vmem>>, vector<2x32xf32>
      %cst_11 = arith.constant 1.250000e-01 : f32
      %13 = vector.broadcast %cst_11 : f32 to vector<2x32xf32>
      %14 = arith.mulf %12, %13 : vector<2x32xf32>
      %c0_12 = arith.constant 0 : index
      %c0_13 = arith.constant 0 : index
      %15 = vector.load %arg6[%c0_12, %c0_13] : memref<2x32xf32, #tpu.memory_space<vmem>>, vector<2x32xf32>
      tpu.vector_store %arg6[%c0_12, %c0_13], %14 {strides = array<i32>} : memref<2x32xf32, #tpu.memory_space<vmem>>, vector<2x32xf32>,
      %c0_14 = arith.constant 0 : index
      %c0_15 = arith.constant 0 : index
      %16 = vector.load %arg3[%c0_14, %c0_15] : memref<32x128xf32, #tpu.memory_space<vmem>>, vector<32x128xf32>
      %cst_16 = arith.constant dense<0.000000e+00> : vector<2x128xf32>
      %17 = tpu.matmul %14, %16, %cst_16 {dimension_numbers = #tpu.dot_dimension_numbers<[1], [0], [0], [1], [0, 0, 1, 1], [], []>} : vector<2x32xf32>, vector<32x128xf32>, vector<2x128xf32> -> vector<2x128xf32>
      %c0_17 = arith.constant 0 : index
      %c0_18 = arith.constant 0 : index
      %18 = vector.load %arg4[%c0_17, %c0_18] : memref<1x128xf32, #tpu.memory_space<vmem>>, vector<1x128xf32>
      %19 = vector.broadcast %18 : vector<1x128xf32> to vector<2x128xf32>
      %20 = arith.addf %17, %19 : vector<2x128xf32>
      %c0_19 = arith.constant 0 : index
      %c0_20 = arith.constant 0 : index
      %21 = vector.load %arg5[%c0_19, %c0_20] : memref<2x128xf32, #tpu.memory_space<vmem>>, vector<2x128xf32>
      tpu.vector_store %arg5[%c0_19, %c0_20], %20 {strides = array<i32>} : memref<2x128xf32, #tpu.memory_space<vmem>>, vector<2x128xf32>,
    } else {
    }
    return
  }
  func.func @transform_0(%arg0: i32, %arg1: i32) -> (i32, i32, i32) {
    %c0_i32 = arith.constant 0 : i32
    %c0_i32_0 = arith.constant 0 : i32
    return %arg0, %arg1, %c0_i32 : i32, i32, i32
  }
  func.func @transform_1(%arg0: i32, %arg1: i32) -> (i32, i32) {
    %c0_i32 = arith.constant 0 : i32
    %c0_i32_0 = arith.constant 0 : i32
    %c0_i32_1 = arith.constant 0 : i32
    return %c0_i32, %c0_i32_0 : i32, i32
  }
  func.func @transform_2(%arg0: i32, %arg1: i32) -> (i32, i32) {
    %c0_i32 = arith.constant 0 : i32
    %c0_i32_0 = arith.constant 0 : i32
    %c0_i32_1 = arith.constant 0 : i32
    return %c0_i32, %c0_i32_0 : i32, i32
  }
  func.func @transform_3(%arg0: i32, %arg1: i32) -> (i32, i32) {
    %c0_i32 = arith.constant 0 : i32
    %c0_i32_0 = arith.constant 0 : i32
    return %arg0, %c0_i32 : i32, i32
  }
  func.func @transform_4(%arg0: i32, %arg1: i32) -> (i32, i32) {
    %c0_i32 = arith.constant 0 : i32
    %c0_i32_0 = arith.constant 0 : i32
    return %arg0, %c0_i32 : i32, i32
  }
}

</mosaic_0001>

<llo_original>
// kernel: tpu_custom_call.1
$region0: #{tpu_custom_call.1}
  #allocation0 [shape = 'u32[]', space=smem, size = 0x4, offset = 0x4, fixed_abs, tag = 'smem constant byte address 0x4 - core index']
  #allocation1 [shape = 'u32[72,128]{1,0:T(1,128)}', space=vmem, size = 0x9000, scoped, tag = 'internal scratch']
  #allocation2 [shape = 'f32[2,32]{1,0:T(2,128)}', space=vmem, size = 0x400, scoped, tag = 'scratch operand']
  %s0 = inlined_call_operand.hbm [shape: bf16[2,8,32], index: 0, kind: input, shape index: {}]
  %s1 = inlined_call_operand.hbm [shape: f32[32,128], index: 1, kind: input, shape index: {}]
  %s2 = inlined_call_operand.vmem [shape: f32[1,128], index: 2, kind: input, shape index: {}]
  %s3 = inlined_call_operand.hbm [shape: f32[2,128], index: 3, kind: output, shape index: {0}]
  %s4 = inlined_call_operand.hbm [shape: f32[2,32], index: 4, kind: output, shape index: {1}]
  %5 = xla_tuple %s3, %s4
  %s6 = sld [smem:[#allocation0]]
  $region46: #{tpu_custom_call.1} parent=0
    _
  %s8 = ssub.s32 1, %s6
  %s9 = scalar_select 0, %s8, %s6
  $region1: #{tpu_custom_call.1} parent=0
    #allocation3 [shape = 'u8[4096]{0}', space=vmem, size = 0x1000, scoped, tag = 'input window, operand 0, single buffered']
    #allocation4 [shape = 's32[1]{0}', space=sflag, size = 0x4, scoped, tag = 'scoped memory for tpu_custom_call.1']
    #allocation5 [shape = 's32[1]{0}', space=sflag, size = 0x4, scoped, tag = 'scoped memory for tpu_custom_call.1']
    #allocation6 [shape = 'u8[16384]{0}', space=vmem, size = 0x4000, scoped, tag = 'input window, operand 1, single buffered']
    #allocation7 [shape = 's32[1]{0}', space=sflag, size = 0x4, scoped, tag = 'scoped memory for tpu_custom_call.1']
    #allocation8 [shape = 'u8[1024]{0}', space=vmem, size = 0x400, scoped, tag = 'output window, operand 0, single buffered']
    #allocation9 [shape = 'u8[1024]{0}', space=vmem, size = 0x400, scoped, tag = 'output window, operand 1, single buffered']
    #allocation10 [shape = 's32[1]{0}', space=sflag, size = 0x4, scoped, tag = 'scoped memory for tpu_custom_call.1']
    %10 = vsyncpa [#allocation4], 0
    %11 = vsyncpa [#allocation7], 0
    %12 = vsyncpa [#allocation5], 0
    %13 = vsyncpa [#allocation10], 0
    // Predicated region
    $region2: #{tpu_custom_call.1} parent=1 // pred_check
      _
    $region3: #{tpu_custom_call.1} parent=1 // pred_check_branch
      %15 = sbr.rel (0) target = $region5
    $region4: #{tpu_custom_call.1} parent=1 // pred_region
      %17 = vsyncadd [#allocation4], 0
      %s18 = sshll.u32 %s0, 4
      %s19 = int_to_ptr.hbm [resolvable:$true] %s18
      %s20 = sshll.u32 [#allocation3], 4
      %s21 = int_to_ptr.vmem [resolvable:$true] %s20
      %26 = dma.hbm_to_vmem [thread:$0]  %s19, 128, %s21, [#allocation4], 64, 64, 4
    $region5: #{tpu_custom_call.1} parent=1 // pred_fallthru
      _
    // Predicated region
    $region6: #{tpu_custom_call.1} parent=1 // pred_check
      _
    $region7: #{tpu_custom_call.1} parent=1 // pred_check_branch
      %28 = sbr.rel (0) target = $region9
    $region8: #{tpu_custom_call.1} parent=1 // pred_region
      %30 = vsyncadd [#allocation7], 0
      %s31 = sshll.u32 %s1, 4
      %s32 = int_to_ptr.hbm [resolvable:$true] %s31
      %s33 = sshll.u32 [#allocation6], 4
      %s34 = int_to_ptr.vmem [resolvable:$true] %s33
      %39 = dma.hbm_to_vmem [thread:$0]  %s32, 512, %s34, [#allocation7], 128, 128, 8
    $region9: #{tpu_custom_call.1} parent=1 // pred_fallthru
      _
    // Predicated region
    $region10: #{tpu_custom_call.1} parent=1 // pred_check
      _
    $region11: #{tpu_custom_call.1} parent=1 // pred_check_branch
      %41 = sbr.rel (0) target = $region13
    $region12: #{tpu_custom_call.1} parent=1 // pred_region
      _
    $region13: #{tpu_custom_call.1} parent=1 // pred_fallthru
      _
    // Predicated region
    $region14: #{tpu_custom_call.1} parent=1 // pred_check
      _
    $region15: #{tpu_custom_call.1} parent=1 // pred_check_branch
      %43 = sbr.rel (0) target = $region17
    $region16: #{tpu_custom_call.1} parent=1 // pred_region
      %45 = dma.done [#allocation4], 128
    $region17: #{tpu_custom_call.1} parent=1 // pred_fallthru
      _
    // Predicated region
    $region18: #{tpu_custom_call.1} parent=1 // pred_check
      _
    $region19: #{tpu_custom_call.1} parent=1 // pred_check_branch
      %47 = sbr.rel (0) target = $region21
    $region20: #{tpu_custom_call.1} parent=1 // pred_region
      %49 = dma.done [#allocation7], 512
    $region21: #{tpu_custom_call.1} parent=1 // pred_fallthru
      _
    %p50 = scmp.eq.s32.totalorder 0, 0
    // Predicated region
    $region22: #{tpu_custom_call.1} parent=1 // pred_check
      %p51 = pneg %p50
    $region23: #{tpu_custom_call.1} parent=1 // pred_check_branch
      %53 = sbr.rel (%p51) target = $region25
    $region24: #{tpu_custom_call.1} parent=1 // pred_region
      %vm54 = vcmask 254976
      %55 = vst.msk [vmem:[#allocation2] sm:$0x3] %vm54, 0.0
    $region25: #{tpu_custom_call.1} parent=1 // pred_fallthru
      _
    %v56 = vld [vmem:[#allocation2] sm:$0x3]
    %v57 = vld [vmem:[#allocation3] sm:$0xf]
    %v58 = vld [vmem:[#allocation3 + $0x4] sm:$0xf]
    %v59 = vunpack.c.l.bf16 %v57
    %v60 = vunpack.c.l.bf16 %v58
    %vm61 = vcmask 261120
    %v62 = vsel %vm61, %v59, 0.0
    %v63 = vrot.slane %v62, 4
    %v64 = vadd.f32 %v62, %v63
    %v65 = vrot.slane %v64, 2
    %v66 = vadd.f32 %v64, %v65
    %v67 = vrot.slane %v66, 1
    %v68 = vadd.f32 %v66, %v67
    %v69 = vsel %vm61, %v60, 0.0
    %v70 = vrot.slane %v69, 4
    %v71 = vadd.f32 %v69, %v70
    %v72 = vrot.slane %v71, 2
    %v73 = vadd.f32 %v71, %v72
    %v74 = vrot.slane %v73, 1
    %v75 = vadd.f32 %v73, %v74
    %vm78 = vcmask 1041409
    %v79 = vsel %vm78, %v75, %v68
    %v81 = vadd.f32 %v56, %v79
    %vm82 = vcmask 254976
    %83 = vst.msk [vmem:[#allocation2] sm:$0x3] %vm82, %v81
    // Predicated region
    $region26: #{tpu_custom_call.1} parent=1 // pred_check
      %p84 = pneg %p50
    $region27: #{tpu_custom_call.1} parent=1 // pred_check_branch
      %86 = sbr.rel (%p84) target = $region29
    $region28: #{tpu_custom_call.1} parent=1 // pred_region
      %v87 = vld [vmem:[#allocation2] sm:$0x3]
      %v88 = vmul.f32 %v87, 0.125
      %89 = vst.msk [vmem:[#allocation9] sm:$0x3] %vm82, %v88
      %v90 = vld [vmem:[#allocation6] sm:$0xff]
      %v91 = vld [vmem:[#allocation6 + $0x8] sm:$0xff]
      %v92 = vld [vmem:[#allocation6 + $0x10] sm:$0xff]
      %v93 = vld [vmem:[#allocation6 + $0x18] sm:$0xff]
      %v94 = vld [vmem:[%s2] sm:$0x1]
      %v96 = vperm.slane %v94, 0
      %v99 = vsel %vm61, %v88, 0
      %101 = vmatpush.msra.mxu0 0.0
      %102 = vmatpush.msra.mxu0 0.0
      %103 = vmatpush.msra.mxu0 0.0
      %104 = vmatpush.msra.mxu0 0.0
      %105 = vmatpush.msra.mxu0 0.0
      %106 = vmatpush.msra.mxu0 0.0
      %107 = vmatpush.msra.mxu0 0.0
      %108 = vmatpush.msra.mxu0 0.0
      %109 = vmatpush.msra.mxu0 0.0
      %110 = vmatpush.msra.mxu0 0.0
      %111 = vmatpush.msra.mxu0 0.0
      %112 = vmatpush.msra.mxu0 0.0
      %113 = vmatpush.msra.mxu0 %v93
      %114 = vmatpush.msra.mxu0 %v92
      %115 = vmatpush.msra.mxu0 %v91
      %116 = vmatpush.msra.mxu0 %v90
      %117 = vmatmul.f32.gmra.mxu0 %v99
      %v118 = vpop.f32.mrf.mxu0
      %v119 = vadd.f32 %v96, %v118
      %120 = vdwg.mxu0
      %121 = vst [vmem:[#allocation8] sm:$0x3] %v119
    $region29: #{tpu_custom_call.1} parent=1 // pred_fallthru
      _
    // Predicated region
    $region30: #{tpu_custom_call.1} parent=1 // pred_check
      _
    $region31: #{tpu_custom_call.1} parent=1 // pred_check_branch
      %123 = sbr.rel (0) target = $region33
    $region32: #{tpu_custom_call.1} parent=1 // pred_region
      %125 = vsyncadd [#allocation5], 0
      %s127 = sshll.u32 [#allocation8], 4
      %s128 = int_to_ptr.vmem [resolvable:$true] %s127
      %s129 = sshll.u32 %s3, 4
      %s130 = int_to_ptr.hbm [resolvable:$true] %s129
      %132 = dma.vmem_to_hbm [thread:$0]  %s128, 32, %s130, [#allocation5]
    $region33: #{tpu_custom_call.1} parent=1 // pred_fallthru
      _
    // Predicated region
    $region34: #{tpu_custom_call.1} parent=1 // pred_check
      _
    $region35: #{tpu_custom_call.1} parent=1 // pred_check_branch
      %134 = sbr.rel (0) target = $region37
    $region36: #{tpu_custom_call.1} parent=1 // pred_region
      %136 = vsyncadd [#allocation10], 0
      %s138 = sshll.u32 [#allocation9], 4
      %s139 = int_to_ptr.vmem [resolvable:$true] %s138
      %s140 = sshll.u32 %s4, 4
      %s141 = int_to_ptr.hbm [resolvable:$true] %s140
      %143 = dma.vmem_to_hbm [thread:$0]  %s139, 32, %s141, [#allocation10]
    $region37: #{tpu_custom_call.1} parent=1 // pred_fallthru
      _
    // Predicated region
    $region38: #{tpu_custom_call.1} parent=1 // pred_check
      _
    $region39: #{tpu_custom_call.1} parent=1 // pred_check_branch
      %145 = sbr.rel (0) target = $region41
    $region40: #{tpu_custom_call.1} parent=1 // pred_region
      %147 = dma.done [#allocation5], 32
    $region41: #{tpu_custom_call.1} parent=1 // pred_fallthru
      _
    // Predicated region
    $region42: #{tpu_custom_call.1} parent=1 // pred_check
      _
    $region43: #{tpu_custom_call.1} parent=1 // pred_check_branch
      %149 = sbr.rel (0) target = $region45
    $region44: #{tpu_custom_call.1} parent=1 // pred_region
      %151 = dma.done [#allocation10], 32
    $region45: #{tpu_custom_call.1} parent=1 // pred_fallthru
      _
    %152 = vsyncpa [#allocation4], 1
    %153 = vsyncpa [#allocation7], 1
    %154 = vsyncpa [#allocation5], 1
    %155 = vsyncpa [#allocation10], 1

</llo_original>
